<compile_context>
chip_gen: v6e
topology: v6e:2x2x1
jax: 0.10.0
libtpu: 0.0.40
codegen_flags: <defaults>
</compile_context>

<pallas_src>
import jax
import jax.numpy as jnp
from jax import lax
from jax.experimental import pallas as pl
from jax.experimental.pallas import tpu as pltpu

_LANES = 128
_MAX_CHUNKS = 64          # cap on statically-unrolled 128-lane chunks per step


def _round_up(x, m):
    return ((x + m - 1) // m) * m


def _cdiv(a, b):
    return (a + b - 1) // b


def _vmem_budget():
    """(working-set target, scoped vmem limit) in bytes, per TPU generation."""
    try:
        kind = jax.devices()[0].device_kind.lower()
    except Exception:
        kind = ""
    if "v2" in kind or "v3" in kind:
        return 6 << 20, 12 << 20
    if "v4" in kind or "v5" in kind or "v6" in kind:
        # 128 MiB physical VMEM: large streaming tiles, high scoped limit.
        return 56 << 20, 96 << 20
    # v7x (64 MiB physical VMEM) and unknown parts: stay conservative.
    return 28 << 20, 40 << 20


def _plan_tiles(B, C, HW, itemsize, hidden, target_bytes):
    """Pick (TB, TR, TS): batch entries / x rows / spatial lanes per block."""
    hw_r = _round_up(HW, _LANES)

    def resident_bytes(tb):
        tr = tb * C
        acc = 4 * tr * _LANES                                  # f32 acc scratch
        head = 2 * 4 * (tr * hidden + tb * tr + 2 * hidden + 1)  # 2x-buffered
        return acc + head

    def min_x_bytes(tb):                        # two x buffers at minimal TS
        return 2 * tb * C * _LANES * itemsize

    # TB must divide B and be a multiple of 8 (so the x row block and the
    # (TB, 1) output block satisfy the (8,128) rule with all blocks full), or
    # be exactly B.  Prefer >=2 batch blocks so both v7x TensorCores stream.
    cands = []
    if B >= 16 and B % 8 == 0:
        half = B // 2
        if half % 8 == 0:
            cands.append(half)
        cands.append(8)
    cands.append(B)
    TB = min(cands)                              # smallest-footprint fallback
    for tb in cands:
        if resident_bytes(tb) + min_x_bytes(tb) <= target_bytes:
            TB = tb
            break
    TR = TB * C

    # TS: multiple of 128 sized so the two x buffers fill the remaining
    # budget, capped so the static in-kernel chunk loop stays short.
    avail = max(target_bytes - resident_bytes(TB), 2 * TR * _LANES * itemsize)
    ts_budget = (avail // (2 * TR * itemsize) // _LANES) * _LANES
    TS = max(_LANES, min(hw_r, _MAX_CHUNKS * _LANES, ts_budget))
    return TB, TR, TS


def _make_kernel(*, inv_hw, ts, hw, nk):
    full_chunks = ts // _LANES
    tail_valid = hw - (nk - 1) * ts             # valid spatial lanes, last step
    tail_full = tail_valid // _LANES
    tail_part = tail_valid % _LANES
    has_tail = (tail_full != full_chunks) or (tail_part != 0)

    def _reduce_tile(x_ref, n_full, n_part):
        """Sum the first n_full*128 (+ n_part masked) lanes of the (TR, TS)
        tile into a (TR, 128) f32 value.  Static ref-sliced chunk loads keep
        vreg pressure bounded; round-robin partials give the VPU ILP."""
        n_chunks = n_full + (1 if n_part else 0)
        npar = max(1, min(4, n_chunks))
        parts = [None] * npar
        for j in range(n_chunks):
            ch = x_ref[:, j * _LANES:(j + 1) * _LANES].astype(jnp.float32)
            if n_part and j == n_full:          # ragged tail: zero lanes >= n_part
                lane = lax.broadcasted_iota(jnp.int32, ch.shape, 1)
                ch = jnp.where(lane < n_part, ch, 0.0)
            s = j % npar
            parts[s] = ch if parts[s] is None else parts[s] + ch
        total = parts[0]
        for p in parts[1:]:
            total = total + p
        return total

    def kernel(x_ref, w1r_ref, b1_ref, w2_ref, b2_ref, esel_ref, o_ref, acc_ref):
        k = pl.program_id(1)

        @pl.when(k == 0)
        def _():
            acc_ref[...] = jnp.zeros_like(acc_ref)

        if has_tail:
            @pl.when(k < nk - 1)
            def _():
                acc_ref[...] += _reduce_tile(x_ref, full_chunks, 0)

            @pl.when(k == nk - 1)
            def _():
                acc_ref[...] += _reduce_tile(x_ref, tail_full, tail_part)
        else:
            acc_ref[...] += _reduce_tile(x_ref, full_chunks, 0)

        @pl.when(k == nk - 1)
        def _():
            # One cross-lane reduce per batch block, then the fused head:
            # mean -> fc1 -> relu -> dropout(p=0)==identity -> fc2 -> abs.
            row_sum = jnp.sum(acc_ref[...], axis=-1, keepdims=True)     # (TR, 1)
            # pooled(TB,C) @ w1  ==  esel(TB,TR) @ (row_sum * tile(w1, TB));
            # stays on MXU/VPU and avoids an in-kernel (TR,)->(TB,C) relayout.
            g = row_sum * w1r_ref[...]                                   # (TR, H)
            h = jnp.dot(esel_ref[...], g,
                        preferred_element_type=jnp.float32) * inv_hw     # (TB, H)
            h = jnp.maximum(h + b1_ref[...], 0.0)
            y = jnp.dot(h, w2_ref[...], preferred_element_type=jnp.float32)
            o_ref[...] = jnp.abs(y + b2_ref[...])                        # (TB, 1)

    return kernel


def holistic_head(x_nchw, w1, b1, w2, b2):
    """x: (B, C, H, W); w1: (C, 256); b1: (256,); w2: (256, 1); b2: (1,).
    Returns |relu(mean_hw(x) @ w1 + b1) @ w2 + b2| with shape (B, 1), f32."""
    B, C, H, W = x_nchw.shape
    HW = H * W
    hidden = w1.shape[1]
    itemsize = jnp.dtype(x_nchw.dtype).itemsize

    target_bytes, vmem_limit = _vmem_budget()
    TB, TR, TS = _plan_tiles(B, C, HW, itemsize, hidden, target_bytes)
    nb = B // TB
    nk = _cdiv(HW, TS)

    x2d = x_nchw.reshape(B * C, HW)                        # free (contiguous)
    w1_f32 = w1.astype(jnp.float32)
    w1rep = jnp.tile(w1_f32, (TB, 1))                      # (TR, hidden)
    esel = jnp.repeat(jnp.eye(TB, dtype=jnp.float32), C, axis=1)   # (TB, TR)

    kernel = _make_kernel(inv_hw=1.0 / float(HW), ts=TS, hw=HW, nk=nk)

    return pl.pallas_call(
        kernel,
        out_shape=jax.ShapeDtypeStruct((B, 1), jnp.float32),
        grid=(nb, nk),
        in_specs=[
            pl.BlockSpec((TR, TS), lambda b, k: (b, k)),           # x stream
            pl.BlockSpec((TR, hidden), lambda b, k: (0, 0)),       # tiled w1
            pl.BlockSpec((1, hidden), lambda b, k: (0, 0)),        # b1
            pl.BlockSpec((hidden, 1), lambda b, k: (0, 0)),        # w2
            pl.BlockSpec((1, 1), lambda b, k: (0, 0)),             # b2
            pl.BlockSpec((TB, TR), lambda b, k: (0, 0)),           # batch select
        ],
        out_specs=pl.BlockSpec((TB, 1), lambda b, k: (b, 0)),
        scratch_shapes=[pltpu.VMEM((TR, _LANES), jnp.float32)],
        compiler_params=pltpu.CompilerParams(
            dimension_semantics=("parallel", "arbitrary"),
            vmem_limit_bytes=vmem_limit,
        ),
    )(x2d, w1rep,
      b1.reshape(1, -1).astype(jnp.float32),
      w2.astype(jnp.float32),
      b2.reshape(1, 1).astype(jnp.float32),
      esel)


def holistic_head_ref(x_nchw, w1, b1, w2, b2):
    pooled = jnp.mean(x_nchw.astype(jnp.float32), axis=(2, 3))
    h = jnp.maximum(pooled @ w1 + b1, 0.0)
    return jnp.abs(h @ w2 + b2)


if __name__ == "__main__":
    # Small shapes consistent with the module: batch=2, in_dim=4, spatial=16x16.
    B, C, H, W = 2, 4, 16, 16
    HIDDEN = 256     # fc1 output width is fixed to 256 by the module

    key = jax.random.PRNGKey(0)
    kx, k1, k2, k3, k4 = jax.random.split(key, 5)

    x = jax.random.normal(kx, (B, C, H, W), dtype=jnp.float32)
    # Parameters stored transposed w.r.t. nn.Linear so the kernel computes x @ W.
    w1 = jax.random.normal(k1, (C, HIDDEN), dtype=jnp.float32) * 0.1
    b1 = jax.random.normal(k2, (HIDDEN,), dtype=jnp.float32) * 0.1
    w2 = jax.random.normal(k3, (HIDDEN, 1), dtype=jnp.float32) * 0.1
    b2 = jax.random.normal(k4, (1,), dtype=jnp.float32) * 0.1

    out = jax.block_until_ready(holistic_head(x, w1, b1, w2, b2))
    ref = holistic_head_ref(x, w1, b1, w2, b2)

    assert out.shape == (B, 1), out.shape
    assert jnp.allclose(out, ref, atol=1e-4, rtol=1e-4), (out, ref)
    print("KERNEL_OK")
</pallas_src>

<mosaic_0001>
module attributes {stable_mosaic.version = 11 : i64} {
  func.func @kernel(%arg0: i32, %arg1: i32, %arg2: memref<8x256xf32, #tpu.memory_space<vmem>>, %arg3: memref<8x256xf32, #tpu.memory_space<vmem>>, %arg4: memref<1x256xf32, #tpu.memory_space<vmem>>, %arg5: memref<256x1xf32, #tpu.memory_space<vmem>>, %arg6: memref<1x1xf32, #tpu.memory_space<vmem>>, %arg7: memref<2x8xf32, #tpu.memory_space<vmem>>, %arg8: memref<2x1xf32, #tpu.memory_space<vmem>>, %arg9: memref<8x128xf32, #tpu.memory_space<vmem>>) attributes {dimension_semantics = [#tpu.dimension_semantics<parallel>, #tpu.dimension_semantics<arbitrary>], iteration_bounds = array<i64: 1, 1>, scalar_prefetch = 0 : i64, scratch_operands = 1 : i64, tpu.core_type = #tpu.core_type<tc>, window_params = [{transform_indices = @transform_0, window_bounds = array<i64: 8, 256>}, {pipeline_mode = #tpu.pipeline_mode<synchronous>, transform_indices = @transform_1, window_bounds = array<i64: 8, 256>}, {pipeline_mode = #tpu.pipeline_mode<synchronous>, transform_indices = @transform_2, window_bounds = array<i64: 1, 256>}, {pipeline_mode = #tpu.pipeline_mode<synchronous>, transform_indices = @transform_3, window_bounds = array<i64: 256, 1>}, {pipeline_mode = #tpu.pipeline_mode<synchronous>, transform_indices = @transform_4, window_bounds = array<i64: 1, 1>}, {pipeline_mode = #tpu.pipeline_mode<synchronous>, transform_indices = @transform_5, window_bounds = array<i64: 2, 8>}, {transform_indices = @transform_6, window_bounds = array<i64: 2, 1>}]} {
    %c0_i32 = arith.constant 0 : i32
    %0 = arith.cmpi eq, %arg1, %c0_i32 : i32
    %1 = arith.extui %0 : i1 to i32
    %c0_i32_0 = arith.constant 0 : i32
    %2 = arith.cmpi ne, %1, %c0_i32_0 : i32
    scf.if %2 {
      %cst = arith.constant 0.000000e+00 : f32
      %12 = vector.broadcast %cst : f32 to vector<8x128xf32>
      %c0_9 = arith.constant 0 : index
      %c0_10 = arith.constant 0 : index
      %13 = vector.load %arg9[%c0_9, %c0_10] : memref<8x128xf32, #tpu.memory_space<vmem>>, vector<8x128xf32>
      tpu.vector_store %arg9[%c0_9, %c0_10], %12 {strides = array<i32>} : memref<8x128xf32, #tpu.memory_space<vmem>>, vector<8x128xf32>,
    } else {
    }
    %c0 = arith.constant 0 : index
    %c0_1 = arith.constant 0 : index
    %3 = vector.load %arg9[%c0, %c0_1] : memref<8x128xf32, #tpu.memory_space<vmem>>, vector<8x128xf32>
    %c0_2 = arith.constant 0 : index
    %c0_3 = arith.constant 0 : index
    %4 = vector.load %arg2[%c0_2, %c0_3] : memref<8x256xf32, #tpu.memory_space<vmem>>, vector<8x128xf32>
    %c0_4 = arith.constant 0 : index
    %c128 = arith.constant 128 : index
    %5 = vector.load %arg2[%c0_4, %c128] : memref<8x256xf32, #tpu.memory_space<vmem>>, vector<8x128xf32>
    %6 = arith.addf %4, %5 : vector<8x128xf32>
    %7 = arith.addf %3, %6 : vector<8x128xf32>
    %c0_5 = arith.constant 0 : index
    %c0_6 = arith.constant 0 : index
    %8 = vector.load %arg9[%c0_5, %c0_6] : memref<8x128xf32, #tpu.memory_space<vmem>>, vector<8x128xf32>
    tpu.vector_store %arg9[%c0_5, %c0_6], %7 {strides = array<i32>} : memref<8x128xf32, #tpu.memory_space<vmem>>, vector<8x128xf32>,
    %c0_i32_7 = arith.constant 0 : i32
    %9 = arith.cmpi eq, %arg1, %c0_i32_7 : i32
    %10 = arith.extui %9 : i1 to i32
    %c0_i32_8 = arith.constant 0 : i32
    %11 = arith.cmpi ne, %10, %c0_i32_8 : i32
    scf.if %11 {
      %c0_9 = arith.constant 0 : index
      %c0_10 = arith.constant 0 : index
      %12 = vector.load %arg9[%c0_9, %c0_10] : memref<8x128xf32, #tpu.memory_space<vmem>>, vector<8x128xf32>
      %cst = arith.constant dense<0.000000e+00> : vector<8xf32>
      %13 = vector.multi_reduction <add>, %12, %cst [1] : vector<8x128xf32> to vector<8xf32>
      %14 = vector.shape_cast %13 : vector<8xf32> to vector<8x1xf32>
      %c0_11 = arith.constant 0 : index
      %c0_12 = arith.constant 0 : index
      %15 = vector.load %arg3[%c0_11, %c0_12] : memref<8x256xf32, #tpu.memory_space<vmem>>, vector<8x256xf32>
      %16 = vector.broadcast %14 : vector<8x1xf32> to vector<8x256xf32>
      %17 = arith.mulf %16, %15 : vector<8x256xf32>
      %c0_13 = arith.constant 0 : index
      %c0_14 = arith.constant 0 : index
      %18 = vector.load %arg7[%c0_13, %c0_14] : memref<2x8xf32, #tpu.memory_space<vmem>>, vector<2x8xf32>
      %cst_15 = arith.constant dense<0.000000e+00> : vector<2x256xf32>
      %19 = tpu.matmul %18, %17, %cst_15 {dimension_numbers = #tpu.dot_dimension_numbers<[1], [0], [0], [1], [0, 0, 1, 1], [], []>} : vector<2x8xf32>, vector<8x256xf32>, vector<2x256xf32> -> vector<2x256xf32>
      %cst_16 = arith.constant 3.906250e-03 : f32
      %20 = vector.broadcast %cst_16 : f32 to vector<2x256xf32>
      %21 = arith.mulf %19, %20 : vector<2x256xf32>
      %c0_17 = arith.constant 0 : index
      %c0_18 = arith.constant 0 : index
      %22 = vector.load %arg4[%c0_17, %c0_18] : memref<1x256xf32, #tpu.memory_space<vmem>>, vector<1x256xf32>
      %23 = vector.broadcast %22 : vector<1x256xf32> to vector<2x256xf32>
      %24 = arith.addf %21, %23 : vector<2x256xf32>
      %cst_19 = arith.constant 0.000000e+00 : f32
      %25 = vector.broadcast %cst_19 : f32 to vector<2x256xf32>
      %26 = arith.maximumf %24, %25 : vector<2x256xf32>
      %c0_20 = arith.constant 0 : index
      %c0_21 = arith.constant 0 : index
      %27 = vector.load %arg5[%c0_20, %c0_21] : memref<256x1xf32, #tpu.memory_space<vmem>>, vector<256x1xf32>
      %cst_22 = arith.constant dense<0.000000e+00> : vector<2x1xf32>
      %28 = tpu.matmul %26, %27, %cst_22 {dimension_numbers = #tpu.dot_dimension_numbers<[1], [0], [0], [1], [0, 0, 1, 1], [], []>} : vector<2x256xf32>, vector<256x1xf32>, vector<2x1xf32> -> vector<2x1xf32>
      %c0_23 = arith.constant 0 : index
      %c0_24 = arith.constant 0 : index
      %29 = vector.load %arg6[%c0_23, %c0_24] : memref<1x1xf32, #tpu.memory_space<vmem>>, vector<1x1xf32>
      %30 = vector.broadcast %29 : vector<1x1xf32> to vector<2x1xf32>
      %31 = arith.addf %28, %30 : vector<2x1xf32>
      %32 = math.absf %31 : vector<2x1xf32>
      %c0_25 = arith.constant 0 : index
      %c0_26 = arith.constant 0 : index
      %33 = vector.load %arg8[%c0_25, %c0_26] : memref<2x1xf32, #tpu.memory_space<vmem>>, vector<2x1xf32>
      tpu.vector_store %arg8[%c0_25, %c0_26], %32 {strides = array<i32>} : memref<2x1xf32, #tpu.memory_space<vmem>>, vector<2x1xf32>,
    } else {
    }
    return
  }
  func.func @transform_0(%arg0: i32, %arg1: i32) -> (i32, i32) {
    %c0_i32 = arith.constant 0 : i32
    return %arg0, %arg1 : i32, i32
  }
  func.func @transform_1(%arg0: i32, %arg1: i32) -> (i32, i32) {
    %c0_i32 = arith.constant 0 : i32
    %c0_i32_0 = arith.constant 0 : i32
    %c0_i32_1 = arith.constant 0 : i32
    return %c0_i32, %c0_i32_0 : i32, i32
  }
  func.func @transform_2(%arg0: i32, %arg1: i32) -> (i32, i32) {
    %c0_i32 = arith.constant 0 : i32
    %c0_i32_0 = arith.constant 0 : i32
    %c0_i32_1 = arith.constant 0 : i32
    return %c0_i32, %c0_i32_0 : i32, i32
  }
  func.func @transform_3(%arg0: i32, %arg1: i32) -> (i32, i32) {
    %c0_i32 = arith.constant 0 : i32
    %c0_i32_0 = arith.constant 0 : i32
    %c0_i32_1 = arith.constant 0 : i32
    return %c0_i32, %c0_i32_0 : i32, i32
  }
  func.func @transform_4(%arg0: i32, %arg1: i32) -> (i32, i32) {
    %c0_i32 = arith.constant 0 : i32
    %c0_i32_0 = arith.constant 0 : i32
    %c0_i32_1 = arith.constant 0 : i32
    return %c0_i32, %c0_i32_0 : i32, i32
  }
  func.func @transform_5(%arg0: i32, %arg1: i32) -> (i32, i32) {
    %c0_i32 = arith.constant 0 : i32
    %c0_i32_0 = arith.constant 0 : i32
    %c0_i32_1 = arith.constant 0 : i32
    return %c0_i32, %c0_i32_0 : i32, i32
  }
  func.func @transform_6(%arg0: i32, %arg1: i32) -> (i32, i32) {
    %c0_i32 = arith.constant 0 : i32
    %c0_i32_0 = arith.constant 0 : i32
    return %arg0, %c0_i32 : i32, i32
  }
}

</mosaic_0001>

<llo_original>
// kernel: tpu_custom_call.1
$region0: #{tpu_custom_call.1}
  #allocation0 [shape = 'u32[]', space=smem, size = 0x4, offset = 0x4, fixed_abs, tag = 'smem constant byte address 0x4 - core index']
  #allocation1 [shape = 'u32[144,128]{1,0:T(1,128)}', space=vmem, size = 0x12000, scoped, tag = 'internal scratch']
  #allocation2 [shape = 'f32[8,128]{1,0:T(8,128)}', space=vmem, size = 0x1000, scoped, tag = 'scratch operand']
  #allocation3 [shape = 'f32[1,1]{1,0:T(1,128)S(1)}', space=vmem, size = 0x200, scoped, tag = 'scoped memory for tpu_custom_call.1']
  %s0 = inlined_call_operand.vmem [shape: f32[8,256], index: 0, kind: input, shape index: {}]
  %s1 = inlined_call_operand.vmem [shape: f32[8,256], index: 1, kind: input, shape index: {}]
  %s2 = inlined_call_operand.vmem [shape: f32[1,256], index: 2, kind: input, shape index: {}]
  %s3 = inlined_call_operand.vmem [shape: f32[256,1], index: 3, kind: input, shape index: {}]
  %s4 = inlined_call_operand.<no memory space> [shape: f32[1,1], index: 4, kind: input, shape index: {}]
  %s5 = inlined_call_operand.vmem [shape: f32[2,8], index: 5, kind: input, shape index: {}]
  %s6 = inlined_call_operand.vmem [shape: f32[2,1], index: 6, kind: output, shape index: {}]
  %s7 = sld [smem:[#allocation0]]
  $region42: #{tpu_custom_call.1} parent=0
    _
  %s9 = ssub.s32 1, %s7
  %s10 = scalar_select 0, %s9, %s7
  %v11 = vstv %s4
  %12 = vst [vmem:[#allocation3] sm:$0x1] %v11
  // Predicated region
  $region2: #{tpu_custom_call.1} parent=0 // pred_check
    _
  $region3: #{tpu_custom_call.1} parent=0 // pred_check_branch
    %14 = sbr.rel (0) target = $region5
  $region4: #{tpu_custom_call.1} parent=0 // pred_region
    _
  $region5: #{tpu_custom_call.1} parent=0 // pred_fallthru
    _
  // Predicated region
  $region6: #{tpu_custom_call.1} parent=0 // pred_check
    _
  $region7: #{tpu_custom_call.1} parent=0 // pred_check_branch
    %16 = sbr.rel (0) target = $region9
  $region8: #{tpu_custom_call.1} parent=0 // pred_region
    _
  $region9: #{tpu_custom_call.1} parent=0 // pred_fallthru
    _
  // Predicated region
  $region10: #{tpu_custom_call.1} parent=0 // pred_check
    _
  $region11: #{tpu_custom_call.1} parent=0 // pred_check_branch
    %18 = sbr.rel (0) target = $region13
  $region12: #{tpu_custom_call.1} parent=0 // pred_region
    _
  $region13: #{tpu_custom_call.1} parent=0 // pred_fallthru
    _
  // Predicated region
  $region14: #{tpu_custom_call.1} parent=0 // pred_check
    _
  $region15: #{tpu_custom_call.1} parent=0 // pred_check_branch
    %20 = sbr.rel (0) target = $region17
  $region16: #{tpu_custom_call.1} parent=0 // pred_region
    _
  $region17: #{tpu_custom_call.1} parent=0 // pred_fallthru
    _
  // Predicated region
  $region18: #{tpu_custom_call.1} parent=0 // pred_check
    _
  $region19: #{tpu_custom_call.1} parent=0 // pred_check_branch
    %22 = sbr.rel (0) target = $region21
  $region20: #{tpu_custom_call.1} parent=0 // pred_region
    _
  $region21: #{tpu_custom_call.1} parent=0 // pred_fallthru
    _
  // Predicated region
  $region22: #{tpu_custom_call.1} parent=0 // pred_check
    _
  $region23: #{tpu_custom_call.1} parent=0 // pred_check_branch
    %24 = sbr.rel (0) target = $region25
  $region24: #{tpu_custom_call.1} parent=0 // pred_region
    _
  $region25: #{tpu_custom_call.1} parent=0 // pred_fallthru
    _
  %p25 = scmp.eq.s32.totalorder 0, 0
  // Predicated region
  $region26: #{tpu_custom_call.1} parent=0 // pred_check
    %p26 = pneg %p25
  $region27: #{tpu_custom_call.1} parent=0 // pred_check_branch
    %28 = sbr.rel (%p26) target = $region29
  $region28: #{tpu_custom_call.1} parent=0 // pred_region
    %29 = vst [vmem:[#allocation2] sm:$0xff] 0.0
  $region29: #{tpu_custom_call.1} parent=0 // pred_fallthru
    _
  %v30 = vld [vmem:[#allocation2] sm:$0xff]
  %v31 = vld [vmem:[%s0] sm:$0xff]
  %v32 = vld [vmem:[%s0 + $0x8] sm:$0xff]
  %v33 = vadd.f32 %v31, %v32
  %v34 = vadd.f32 %v30, %v33
  %35 = vst [vmem:[#allocation2] sm:$0xff] %v34
  // Predicated region
  $region30: #{tpu_custom_call.1} parent=0 // pred_check
    %p36 = pneg %p25
  $region31: #{tpu_custom_call.1} parent=0 // pred_check_branch
    %38 = sbr.rel (%p36) target = $region33
  $region32: #{tpu_custom_call.1} parent=0 // pred_region
    %v39 = vld [vmem:[#allocation2] sm:$0xff]
    %40 = vadd.xlane.f32.xlu0 %v39
    %v41 = vpop.xlane.xlu0 %40
    %v42 = vld [vmem:[%s1] sm:$0xff]
    %v43 = vld [vmem:[%s1 + $0x8] sm:$0xff]
    %v44 = vmul.f32 %v41, %v42
    %v45 = vmul.f32 %v41, %v43
    %v46 = vld [vmem:[%s5] sm:$0x3]
    %vm47 = vcmask 64512
    %v49 = vsel %vm47, %v46, 0
    %51 = vmatprep.subr.mxu0 0.0
    %52 = vmatpush1.msra.mxu0 0.0
    %53 = vmatprep.subr.mxu0 0.0
    %54 = vmatpush1.msra.mxu0 0.0
    %55 = vmatprep.subr.mxu0 0.0
    %56 = vmatpush1.msra.mxu0 0.0
    %57 = vmatprep.subr.mxu0 0.0
    %58 = vmatpush1.msra.mxu0 0.0
    %59 = vmatprep.subr.mxu0 0.0
    %60 = vmatpush1.msra.mxu0 0.0
    %61 = vmatprep.subr.mxu0 0.0
    %62 = vmatpush1.msra.mxu0 0.0
    %63 = vmatprep.subr.mxu0 0.0
    %64 = vmatpush1.msra.mxu0 0.0
    %65 = vmatprep.subr.mxu0 0.0
    %66 = vmatpush1.msra.mxu0 0.0
    %67 = vmatprep.subr.mxu0 0.0
    %68 = vmatpush1.msra.mxu0 0.0
    %69 = vmatprep.subr.mxu0 0.0
    %70 = vmatpush1.msra.mxu0 0.0
    %71 = vmatprep.subr.mxu0 0.0
    %72 = vmatpush1.msra.mxu0 0.0
    %73 = vmatprep.subr.mxu0 0.0
    %74 = vmatpush1.msra.mxu0 0.0
    %75 = vmatprep.subr.mxu0 0.0
    %76 = vmatpush1.msra.mxu0 0.0
    %77 = vmatprep.subr.mxu0 0.0
    %78 = vmatpush1.msra.mxu0 0.0
    %79 = vmatprep.subr.mxu0 0.0
    %80 = vmatpush1.msra.mxu0 0.0
    %81 = vmatprep.subr.mxu0 %v45
    %82 = vmatpush1.msra.mxu0 %v44
    %83 = vmatprep.subr.mxu0 0.0
    %84 = vmatpush2.msra.mxu0 0.0
    %85 = vmatprep.subr.mxu0 0.0
    %86 = vmatpush2.msra.mxu0 0.0
    %87 = vmatprep.subr.mxu0 0.0
    %88 = vmatpush2.msra.mxu0 0.0
    %89 = vmatprep.subr.mxu0 0.0
    %90 = vmatpush2.msra.mxu0 0.0
    %91 = vmatprep.subr.mxu0 0.0
    %92 = vmatpush2.msra.mxu0 0.0
    %93 = vmatprep.subr.mxu0 0.0
    %94 = vmatpush2.msra.mxu0 0.0
    %95 = vmatprep.subr.mxu0 0.0
    %96 = vmatpush2.msra.mxu0 0.0
    %97 = vmatprep.subr.mxu0 0.0
    %98 = vmatpush2.msra.mxu0 0.0
    %99 = vmatprep.subr.mxu0 0.0
    %100 = vmatpush2.msra.mxu0 0.0
    %101 = vmatprep.subr.mxu0 0.0
    %102 = vmatpush2.msra.mxu0 0.0
    %103 = vmatprep.subr.mxu0 0.0
    %104 = vmatpush2.msra.mxu0 0.0
    %105 = vmatprep.subr.mxu0 0.0
    %106 = vmatpush2.msra.mxu0 0.0
    %107 = vmatprep.subr.mxu0 0.0
    %108 = vmatpush2.msra.mxu0 0.0
    %109 = vmatprep.subr.mxu0 0.0
    %110 = vmatpush2.msra.mxu0 0.0
    %111 = vmatprep.subr.mxu0 0.0
    %112 = vmatpush2.msra.mxu0 0.0
    %113 = vmatprep.subr.mxu0 0.0
    %114 = vmatpush2.msra.mxu0 0.0
    %115 = vmatprep.mubr.f32.mxu0 0.0
    %116 = vmatmul.mubr.f32.gmra.mxu0 %v49
    %v117 = vpop.f32.mrf.mxu0
    %v118 = vadd.f32 0.0, %v117
    %v119 = vpop.f32.mrf.mxu0
    %v120 = vadd.f32 0.0, %v119
    %121 = vdwg.mxu0
    %v122 = vmul.f32 %v118, 0.00390625
    %v123 = vmul.f32 %v120, 0.00390625
    %v124 = vld [vmem:[%s2] sm:$0x3]
    %v126 = vlaneseq
    %v127 = vshrl.u32 %v126, 7
    %v128 = vsub.s32 0, %v127
    %v129 = vrot.slane %v124, %v128
    %v130 = vlaneseq
    %v131 = vshrl.u32 %v130, 7
    %v132 = vsub.s32 1, %v131
    %v133 = vrot.slane %v124, %v132
    %v136 = vadd.f32 %v122, %v129
    %v137 = vadd.f32 %v123, %v133
    %v138 = vmax.f32 %v136, 0.0
    %v139 = vmax.f32 %v137, 0.0
    %v140 = vld [vmem:[%s3] sm:$0xff]
    %v141 = vld [vmem:[%s3 + $0x8] sm:$0xff]
    %v142 = vld [vmem:[%s3 + $0x10] sm:$0xff]
    %v143 = vld [vmem:[%s3 + $0x18] sm:$0xff]
    %v144 = vld [vmem:[%s3 + $0x20] sm:$0xff]
    %v145 = vld [vmem:[%s3 + $0x28] sm:$0xff]
    %v146 = vld [vmem:[%s3 + $0x30] sm:$0xff]
    %v147 = vld [vmem:[%s3 + $0x38] sm:$0xff]
    %v148 = vld [vmem:[%s3 + $0x40] sm:$0xff]
    %v149 = vld [vmem:[%s3 + $0x48] sm:$0xff]
    %v150 = vld [vmem:[%s3 + $0x50] sm:$0xff]
    %v151 = vld [vmem:[%s3 + $0x58] sm:$0xff]
    %v152 = vld [vmem:[%s3 + $0x60] sm:$0xff]
    %v153 = vld [vmem:[%s3 + $0x68] sm:$0xff]
    %v154 = vld [vmem:[%s3 + $0x70] sm:$0xff]
    %v155 = vld [vmem:[%s3 + $0x78] sm:$0xff]
    %v156 = vld [vmem:[%s3 + $0x80] sm:$0xff]
    %v157 = vld [vmem:[%s3 + $0x88] sm:$0xff]
    %v158 = vld [vmem:[%s3 + $0x90] sm:$0xff]
    %v159 = vld [vmem:[%s3 + $0x98] sm:$0xff]
    %v160 = vld [vmem:[%s3 + $0xa0] sm:$0xff]
    %v161 = vld [vmem:[%s3 + $0xa8] sm:$0xff]
    %v162 = vld [vmem:[%s3 + $0xb0] sm:$0xff]
    %v163 = vld [vmem:[%s3 + $0xb8] sm:$0xff]
    %v164 = vld [vmem:[%s3 + $0xc0] sm:$0xff]
    %v165 = vld [vmem:[%s3 + $0xc8] sm:$0xff]
    %v166 = vld [vmem:[%s3 + $0xd0] sm:$0xff]
    %v167 = vld [vmem:[%s3 + $0xd8] sm:$0xff]
    %v168 = vld [vmem:[%s3 + $0xe0] sm:$0xff]
    %v169 = vld [vmem:[%s3 + $0xe8] sm:$0xff]
    %v170 = vld [vmem:[%s3 + $0xf0] sm:$0xff]
    %v171 = vld [vmem:[%s3 + $0xf8] sm:$0xff]
    %v172 = vld [vmem:[#allocation3] sm:$0x1]
    %v174 = vlaneseq
    %v175 = vshrl.u32 %v174, 7
    %v176 = vsub.s32 0, %v175
    %v177 = vrot.slane %v172, %v176
    %179 = vmatprep.subr.mxu0 0.0
    %180 = vmatpush1.msra.mxu0 %v155
    %181 = vmatprep.subr.mxu0 0.0
    %182 = vmatpush1.msra.mxu0 %v154
    %183 = vmatprep.subr.mxu0 0.0
    %184 = vmatpush1.msra.mxu0 %v153
    %185 = vmatprep.subr.mxu0 0.0
    %186 = vmatpush1.msra.mxu0 %v152
    %187 = vmatprep.subr.mxu0 0.0
    %188 = vmatpush1.msra.mxu0 %v151
    %189 = vmatprep.subr.mxu0 0.0
    %190 = vmatpush1.msra.mxu0 %v150
    %191 = vmatprep.subr.mxu0 0.0
    %192 = vmatpush1.msra.mxu0 %v149
    %193 = vmatprep.subr.mxu0 0.0
    %194 = vmatpush1.msra.mxu0 %v148
    %195 = vmatprep.subr.mxu0 0.0
    %196 = vmatpush1.msra.mxu0 %v147
    %197 = vmatprep.subr.mxu0 0.0
    %198 = vmatpush1.msra.mxu0 %v146
    %199 = vmatprep.subr.mxu0 0.0
    %200 = vmatpush1.msra.mxu0 %v145
    %201 = vmatprep.subr.mxu0 0.0
    %202 = vmatpush1.msra.mxu0 %v144
    %203 = vmatprep.subr.mxu0 0.0
    %204 = vmatpush1.msra.mxu0 %v143
    %205 = vmatprep.subr.mxu0 0.0
    %206 = vmatpush1.msra.mxu0 %v142
    %207 = vmatprep.subr.mxu0 0.0
    %208 = vmatpush1.msra.mxu0 %v141
    %209 = vmatprep.subr.mxu0 0.0
    %210 = vmatpush1.msra.mxu0 %v140
    %211 = vmatprep.subr.mxu0 0.0
    %212 = vmatpush2.msra.mxu0 %v171
    %213 = vmatprep.subr.mxu0 0.0
    %214 = vmatpush2.msra.mxu0 %v170
    %215 = vmatprep.subr.mxu0 0.0
    %216 = vmatpush2.msra.mxu0 %v169
    %217 = vmatprep.subr.mxu0 0.0
    %218 = vmatpush2.msra.mxu0 %v168
    %219 = vmatprep.subr.mxu0 0.0
    %220 = vmatpush2.msra.mxu0 %v167
    %221 = vmatprep.subr.mxu0 0.0
    %222 = vmatpush2.msra.mxu0 %v166
    %223 = vmatprep.subr.mxu0 0.0
    %224 = vmatpush2.msra.mxu0 %v165
    %225 = vmatprep.subr.mxu0 0.0
    %226 = vmatpush2.msra.mxu0 %v164
    %227 = vmatprep.subr.mxu0 0.0
    %228 = vmatpush2.msra.mxu0 %v163
    %229 = vmatprep.subr.mxu0 0.0
    %230 = vmatpush2.msra.mxu0 %v162
    %231 = vmatprep.subr.mxu0 0.0
    %232 = vmatpush2.msra.mxu0 %v161
    %233 = vmatprep.subr.mxu0 0.0
    %234 = vmatpush2.msra.mxu0 %v160
    %235 = vmatprep.subr.mxu0 0.0
    %236 = vmatpush2.msra.mxu0 %v159
    %237 = vmatprep.subr.mxu0 0.0
    %238 = vmatpush2.msra.mxu0 %v158
    %239 = vmatprep.subr.mxu0 0.0
    %240 = vmatpush2.msra.mxu0 %v157
    %241 = vmatprep.subr.mxu0 0.0
    %242 = vmatpush2.msra.mxu0 %v156
    %243 = vmatprep.mubr.f32.mxu0 %v139
    %244 = vmatmul.mubr.f32.gmra.mxu0 %v138
    %v245 = vpop.f32.mrf.mxu0
    %v246 = vadd.f32 %v177, %v245
    %v247 = vpop.f32.mrf.mxu0
    %248 = vdwg.mxu0
    %v249 = vand.u32 2147483647, %v246
    %vm250 = vcmask 1024
    %251 = vst.msk [vmem:[%s6] sm:$0x3] %vm250, %v249
  $region33: #{tpu_custom_call.1} parent=0 // pred_fallthru
    _
  // Predicated region
  $region34: #{tpu_custom_call.1} parent=0 // pred_check
    _
  $region35: #{tpu_custom_call.1} parent=0 // pred_check_branch
    %253 = sbr.rel (0) target = $region37
  $region36: #{tpu_custom_call.1} parent=0 // pred_region
    _
  $region37: #{tpu_custom_call.1} parent=0 // pred_fallthru
    _
  // Predicated region
  $region38: #{tpu_custom_call.1} parent=0 // pred_check
    _
  $region39: #{tpu_custom_call.1} parent=0 // pred_check_branch
    %255 = sbr.rel (0) target = $region41
  $region40: #{tpu_custom_call.1} parent=0 // pred_region
    _
  $region41: #{tpu_custom_call.1} parent=0 // pred_fallthru
    _

</llo_original>
